<compile_context>
chip_gen: v6e
topology: v6e:2x2x1
jax: 0.10.0
libtpu: 0.0.40
codegen_flags: <defaults>
</compile_context>

<pallas_src>
import functools

import jax
import jax.numpy as jnp
from jax.experimental import pallas as pl
from jax.experimental.pallas import tpu as pltpu

EPS = 1e-6


def _round_up(n, m):
    return ((n + m - 1) // m) * m


def _sublayer_connection_kernel(x_ref, y_ref, w1_ref, w2_ref, b_ref,
                                gamma_ref, beta_ref, o_ref, *,
                                d, d_pad, matmul_dtype, approx_recip):
    # x_ref / y_ref: (rt, d_pad) row tiles in their ORIGINAL dtype.
    x_in = x_ref[...]

    # Two MXU pushes accumulating into one f32 result (same FLOPs as a fused
    # K=2*D matmul, but avoids materializing an [x|y] concat in HBM).
    acc = jnp.dot(x_in.astype(matmul_dtype), w1_ref[...],
                  preferred_element_type=jnp.float32)
    acc = acc + jnp.dot(y_ref[...].astype(matmul_dtype), w2_ref[...],
                        preferred_element_type=jnp.float32)

    # Residual (dropout identity in eval mode); LN math in f32 with the
    # un-rounded x so bf16 MXU operands do not drift the residual.
    z = x_in.astype(jnp.float32) + acc + b_ref[...]

    # PyTorch-style LayerNorm over the first `d` lanes:
    #   a_2 * (z - mean) / (std + eps) + b_2, with UNBIASED std (torch.std).
    if d != d_pad:
        lane = jax.lax.broadcasted_iota(jnp.int32, z.shape, 1)
        valid = lane < d
        z_m = jnp.where(valid, z, 0.0)            # exclude padded lanes from the mean
    else:
        z_m = z
    mean = jnp.sum(z_m, axis=-1, keepdims=True) * (1.0 / d)
    diff = z - mean
    diff_m = jnp.where(valid, diff, 0.0) if d != d_pad else diff
    var_unbiased = jnp.sum(diff_m * diff_m, axis=-1, keepdims=True) * (1.0 / (d - 1))
    std = jnp.sqrt(var_unbiased)

    # Reciprocal of (std + eps) on the EUP slot instead of a (rt, d) VPU divide;
    # gamma folded into the per-row scale before the broadcasted multiply-add.
    inv = pl.reciprocal(std + EPS, approx=approx_recip)          # (rt, 1), f32
    out = (gamma_ref[...] * inv) * diff + beta_ref[...]          # padded gamma/beta are 0

    o_ref[...] = out.astype(o_ref.dtype)


def two_input_sublayer_connection(x, y, w1, w2, b, gamma, beta, *,
                                  row_tile=None, matmul_dtype=None,
                                  approx_recip=True):
    """x, y: (B, S, D).  Returns LayerNorm(x + (x @ W1 + y @ W2 + b)).

    matmul_dtype controls only the MXU operands (weights + in-kernel activation
    cast); bf16 is recommended on ALL TPU generations.  Residual / LN math
    always stays in f32.
    """
    B, S, D = x.shape
    assert y.shape == (B, S, D)
    assert D > 1, "unbiased std requires D > 1"
    rows = B * S
    if matmul_dtype is None:
        matmul_dtype = x.dtype
    matmul_dtype = jnp.dtype(matmul_dtype)

    # Lane-dense layout: pad features to a multiple of 128 only when needed.
    # TODO(synk): for D << 128 pack several logical rows per 128-lane vreg for
    # the LN path instead of lane-padding (current scheme wastes bandwidth).
    D_pad = _round_up(D, 128)

    x_bytes = jnp.dtype(x.dtype).itemsize
    y_bytes = jnp.dtype(y.dtype).itemsize
    out_bytes = jnp.dtype(x.dtype).itemsize
    mm_bytes = matmul_dtype.itemsize

    # VMEM budget: ~75% of the chip's capacity (v7x: 64 MiB, v5e/v6e: 128 MiB),
    # leaving headroom for compiler scratch/spill.
    try:
        vmem_cap = int(pltpu.get_tpu_info().vmem_capacity_bytes)
    except Exception:
        vmem_cap = 64 << 20                      # conservative (v7x-sized) fallback
    budget = int(0.75 * vmem_cap)

    # Row tile: large tiles amortize the ~0.35us/grid-step overhead (512-1024
    # rows reach ~85% of HBM roofline); shrunk for tiny inputs / VMEM budget.
    if row_tile is None:
        row_tile = 1024 if D_pad <= 1024 else (512 if D_pad <= 2048 else 256)
    rt = max(16, min(int(row_tile), _round_up(rows, 16)))
    rt = _round_up(rt, 16)

    def footprint(r):
        return (2 * r * D_pad * (x_bytes + y_bytes + out_bytes)   # dbl-buffered act/out
                + 2 * 2 * D_pad * D_pad * mm_bytes                # W1 + W2 (worst case)
                + 3 * D_pad * 4)                                  # bias / gamma / beta
    while rt > 16 and footprint(rt) > budget:
        rt = max(16, _round_up(rt // 2, 16))
    # TODO(synk): if the resident weights alone exceed the budget (very large D,
    # esp. on v7x's 64 MiB VMEM), add N/K grid axes marked "arbitrary" with a
    # VMEM f32 accumulator instead of keeping full W1/W2 resident.

    rows_pad = _round_up(rows, rt)
    vmem_limit = int(min(budget, max(2 * footprint(rt), 32 << 20)))

    # Only pad when actually needed -- the aligned case does zero extra HBM passes.
    x2 = x.reshape(rows, D)
    y2 = y.reshape(rows, D)
    needs_pad = (rows_pad != rows) or (D_pad != D)
    if needs_pad:
        x2 = jnp.pad(x2, ((0, rows_pad - rows), (0, D_pad - D)))
        y2 = jnp.pad(y2, ((0, rows_pad - rows), (0, D_pad - D)))

    def prep_mat(w):
        w = w.astype(matmul_dtype)
        if D_pad != D:
            w = jnp.pad(w, ((0, D_pad - D), (0, D_pad - D)))
        return w

    def prep_vec(v):
        v = v.reshape(1, D).astype(jnp.float32)
        if D_pad != D:
            v = jnp.pad(v, ((0, 0), (0, D_pad - D)))
        return v

    w1p, w2p = prep_mat(w1), prep_mat(w2)
    bp, gp, btp = prep_vec(b), prep_vec(gamma), prep_vec(beta)

    kernel = functools.partial(_sublayer_connection_kernel,
                               d=D, d_pad=D_pad,
                               matmul_dtype=matmul_dtype,
                               approx_recip=approx_recip)
    grid = (rows_pad // rt,)

    def build(single_buffer_consts):
        # Constant-index blocks only ever need one DMA; single-buffering them
        # frees 2*D_pad^2*mm_bytes of VMEM (matters most on v7x's 64 MiB).
        const_kw = {"pipeline_mode": pl.Buffered(1)} if single_buffer_consts else {}
        in_specs = [
            pl.BlockSpec((rt, D_pad), lambda i: (i, 0)),                  # x row tile
            pl.BlockSpec((rt, D_pad), lambda i: (i, 0)),                  # y row tile
            pl.BlockSpec((D_pad, D_pad), lambda i: (0, 0), **const_kw),   # W1 (resident)
            pl.BlockSpec((D_pad, D_pad), lambda i: (0, 0), **const_kw),   # W2 (resident)
            pl.BlockSpec((1, D_pad), lambda i: (0, 0), **const_kw),       # bias
            pl.BlockSpec((1, D_pad), lambda i: (0, 0), **const_kw),       # gamma (a_2)
            pl.BlockSpec((1, D_pad), lambda i: (0, 0), **const_kw),       # beta  (b_2)
        ]
        return pl.pallas_call(
            kernel,
            out_shape=jax.ShapeDtypeStruct((rows_pad, D_pad), x.dtype),
            grid_spec=pltpu.PrefetchScalarGridSpec(
                num_scalar_prefetch=0,
                grid=grid,
                in_specs=in_specs,
                out_specs=pl.BlockSpec((rt, D_pad), lambda i: (i, 0)),
            ),
            compiler_params=pltpu.CompilerParams(
                dimension_semantics=("parallel",),
                vmem_limit_bytes=vmem_limit),
        )

    args = (x2, y2, w1p, w2p, bp, gp, btp)
    try:
        out_p = build(True)(*args)       # single-buffered resident params
    except Exception:
        # TODO(synk): drop fallback once pl.Buffered(1) resident blocks are
        # guaranteed on the deployed JAX version.
        out_p = build(False)(*args)      # default double-buffering

    if needs_pad:
        out_p = out_p[:rows, :D]
    return out_p.reshape(B, S, D)


def _reference(x, y, w1, w2, b, gamma, beta):
    """Plain-JAX reference mirroring the PyTorch forward (eval mode)."""
    x = x.astype(jnp.float32)
    y = y.astype(jnp.float32)
    sub = x @ w1 + y @ w2 + b
    z = x + sub
    d = z.shape[-1]
    mean = jnp.mean(z, axis=-1, keepdims=True)
    diff = z - mean
    std = jnp.sqrt(jnp.sum(diff * diff, axis=-1, keepdims=True) / (d - 1))
    return gamma * diff / (std + EPS) + beta


if __name__ == "__main__":
    B, S, D = 2, 8, 32

    key = jax.random.PRNGKey(0)
    kx, ky, kw1, kw2, kb = jax.random.split(key, 5)

    x = jax.random.normal(kx, (B, S, D), dtype=jnp.float32)
    y = jax.random.normal(ky, (B, S, D), dtype=jnp.float32)

    # Synthetic two-input sublayer parameters (deterministic).
    w1 = jax.random.normal(kw1, (D, D), dtype=jnp.float32) * 0.1
    w2 = jax.random.normal(kw2, (D, D), dtype=jnp.float32) * 0.1
    b = jax.random.normal(kb, (D,), dtype=jnp.float32) * 0.1

    # LayerNorm parameters (module init: ones / zeros).
    gamma = jnp.ones((D,), dtype=jnp.float32)
    beta = jnp.zeros((D,), dtype=jnp.float32)

    ref = _reference(x, y, w1, w2, b, gamma, beta)

    # 1) f32 matmul operands + exact reciprocal: tight semantic check.
    out_f32 = two_input_sublayer_connection(
        x, y, w1, w2, b, gamma, beta,
        matmul_dtype=jnp.float32, approx_recip=False)
    out_f32 = jax.block_until_ready(out_f32)
    assert out_f32.shape == (B, S, D)
    assert jnp.allclose(out_f32, ref, atol=2e-3, rtol=2e-3), "f32 mismatch vs reference"

    # 2) Fast path (recommended on v5e/v6e/v7x): bf16 MXU operands + EUP approx
    #    reciprocal.  Residual / LN math stays in f32 inside the kernel.
    out_fast = two_input_sublayer_connection(
        x, y, w1, w2, b, gamma, beta,
        matmul_dtype=jnp.bfloat16, approx_recip=True)
    out_fast = jax.block_until_ready(out_fast)
    assert out_fast.shape == (B, S, D)
    assert jnp.allclose(out_fast, ref, atol=3e-2, rtol=3e-2), "bf16 mismatch vs reference"

    print("KERNEL_OK")
</pallas_src>

<mosaic_0001>
module attributes {stable_mosaic.version = 11 : i64} {
  func.func @_sublayer_connection_kernel(%arg0: i32, %arg1: memref<16x128xf32, #tpu.memory_space<vmem>>, %arg2: memref<16x128xf32, #tpu.memory_space<vmem>>, %arg3: memref<128x128xf32, #tpu.memory_space<vmem>>, %arg4: memref<128x128xf32, #tpu.memory_space<vmem>>, %arg5: memref<1x128xf32, #tpu.memory_space<vmem>>, %arg6: memref<1x128xf32, #tpu.memory_space<vmem>>, %arg7: memref<1x128xf32, #tpu.memory_space<vmem>>, %arg8: memref<16x128xf32, #tpu.memory_space<vmem>>) attributes {dimension_semantics = [#tpu.dimension_semantics<parallel>], iteration_bounds = array<i64: 1>, scalar_prefetch = 0 : i64, scratch_operands = 0 : i64, tpu.core_type = #tpu.core_type<tc>, window_params = [{transform_indices = @transform_0, window_bounds = array<i64: 16, 128>}, {transform_indices = @transform_1, window_bounds = array<i64: 16, 128>}, {pipeline_mode = #tpu.pipeline_mode<synchronous>, transform_indices = @transform_2, window_bounds = array<i64: 128, 128>}, {pipeline_mode = #tpu.pipeline_mode<synchronous>, transform_indices = @transform_3, window_bounds = array<i64: 128, 128>}, {pipeline_mode = #tpu.pipeline_mode<synchronous>, transform_indices = @transform_4, window_bounds = array<i64: 1, 128>}, {pipeline_mode = #tpu.pipeline_mode<synchronous>, transform_indices = @transform_5, window_bounds = array<i64: 1, 128>}, {pipeline_mode = #tpu.pipeline_mode<synchronous>, transform_indices = @transform_6, window_bounds = array<i64: 1, 128>}, {transform_indices = @transform_7, window_bounds = array<i64: 16, 128>}]} {
    %c0 = arith.constant 0 : index
    %c0_0 = arith.constant 0 : index
    %0 = vector.load %arg1[%c0, %c0_0] : memref<16x128xf32, #tpu.memory_space<vmem>>, vector<16x128xf32>
    %c0_1 = arith.constant 0 : index
    %c0_2 = arith.constant 0 : index
    %1 = vector.load %arg3[%c0_1, %c0_2] : memref<128x128xf32, #tpu.memory_space<vmem>>, vector<128x128xf32>
    %cst = arith.constant dense<0.000000e+00> : vector<16x128xf32>
    %2 = tpu.matmul %0, %1, %cst {dimension_numbers = #tpu.dot_dimension_numbers<[1], [0], [0], [1], [0, 0, 1, 1], [], []>} : vector<16x128xf32>, vector<128x128xf32>, vector<16x128xf32> -> vector<16x128xf32>
    %c0_3 = arith.constant 0 : index
    %c0_4 = arith.constant 0 : index
    %3 = vector.load %arg2[%c0_3, %c0_4] : memref<16x128xf32, #tpu.memory_space<vmem>>, vector<16x128xf32>
    %c0_5 = arith.constant 0 : index
    %c0_6 = arith.constant 0 : index
    %4 = vector.load %arg4[%c0_5, %c0_6] : memref<128x128xf32, #tpu.memory_space<vmem>>, vector<128x128xf32>
    %cst_7 = arith.constant dense<0.000000e+00> : vector<16x128xf32>
    %5 = tpu.matmul %3, %4, %cst_7 {dimension_numbers = #tpu.dot_dimension_numbers<[1], [0], [0], [1], [0, 0, 1, 1], [], []>} : vector<16x128xf32>, vector<128x128xf32>, vector<16x128xf32> -> vector<16x128xf32>
    %6 = arith.addf %2, %5 : vector<16x128xf32>
    %7 = arith.addf %0, %6 : vector<16x128xf32>
    %c0_8 = arith.constant 0 : index
    %c0_9 = arith.constant 0 : index
    %8 = vector.load %arg5[%c0_8, %c0_9] : memref<1x128xf32, #tpu.memory_space<vmem>>, vector<1x128xf32>
    %9 = vector.broadcast %8 : vector<1x128xf32> to vector<16x128xf32>
    %10 = arith.addf %7, %9 : vector<16x128xf32>
    %11 = tpu.iota {dimensions = array<i32: 1>} : vector<16x128xi32>
    %c32_i32 = arith.constant 32 : i32
    %12 = vector.broadcast %c32_i32 : i32 to vector<16x128xi32>
    %13 = arith.cmpi slt, %11, %12 : vector<16x128xi32>
    %cst_10 = arith.constant 0.000000e+00 : f32
    %14 = vector.broadcast %cst_10 : f32 to vector<16x128xf32>
    %15 = arith.select %13, %10, %14 : vector<16x128xi1>, vector<16x128xf32>
    %cst_11 = arith.constant dense<0.000000e+00> : vector<16xf32>
    %16 = vector.multi_reduction <add>, %15, %cst_11 [1] : vector<16x128xf32> to vector<16xf32>
    %17 = vector.shape_cast %16 : vector<16xf32> to vector<16x1xf32>
    %cst_12 = arith.constant 3.125000e-02 : f32
    %18 = vector.broadcast %cst_12 : f32 to vector<16x1xf32>
    %19 = arith.mulf %17, %18 : vector<16x1xf32>
    %20 = vector.broadcast %19 : vector<16x1xf32> to vector<16x128xf32>
    %21 = arith.subf %10, %20 : vector<16x128xf32>
    %cst_13 = arith.constant 0.000000e+00 : f32
    %22 = vector.broadcast %cst_13 : f32 to vector<16x128xf32>
    %23 = arith.select %13, %21, %22 : vector<16x128xi1>, vector<16x128xf32>
    %24 = arith.mulf %23, %23 : vector<16x128xf32>
    %cst_14 = arith.constant dense<0.000000e+00> : vector<16xf32>
    %25 = vector.multi_reduction <add>, %24, %cst_14 [1] : vector<16x128xf32> to vector<16xf32>
    %26 = vector.shape_cast %25 : vector<16xf32> to vector<16x1xf32>
    %cst_15 = arith.constant 0.0322580636 : f32
    %27 = vector.broadcast %cst_15 : f32 to vector<16x1xf32>
    %28 = arith.mulf %26, %27 : vector<16x1xf32>
    %29 = math.sqrt %28 : vector<16x1xf32>
    %cst_16 = arith.constant 9.99999997E-7 : f32
    %30 = vector.broadcast %cst_16 : f32 to vector<16x1xf32>
    %31 = arith.addf %29, %30 : vector<16x1xf32>
    %32 = tpu.reciprocal %31 : vector<16x1xf32> -> vector<16x1xf32>
    %c0_17 = arith.constant 0 : index
    %c0_18 = arith.constant 0 : index
    %33 = vector.load %arg6[%c0_17, %c0_18] : memref<1x128xf32, #tpu.memory_space<vmem>>, vector<1x128xf32>
    %34 = vector.broadcast %33 : vector<1x128xf32> to vector<16x128xf32>
    %35 = vector.broadcast %32 : vector<16x1xf32> to vector<16x128xf32>
    %36 = arith.mulf %34, %35 : vector<16x128xf32>
    %37 = arith.mulf %36, %21 : vector<16x128xf32>
    %c0_19 = arith.constant 0 : index
    %c0_20 = arith.constant 0 : index
    %38 = vector.load %arg7[%c0_19, %c0_20] : memref<1x128xf32, #tpu.memory_space<vmem>>, vector<1x128xf32>
    %39 = vector.broadcast %38 : vector<1x128xf32> to vector<16x128xf32>
    %40 = arith.addf %37, %39 : vector<16x128xf32>
    %c0_21 = arith.constant 0 : index
    %c0_22 = arith.constant 0 : index
    %41 = vector.load %arg8[%c0_21, %c0_22] : memref<16x128xf32, #tpu.memory_space<vmem>>, vector<16x128xf32>
    tpu.vector_store %arg8[%c0_21, %c0_22], %40 {strides = array<i32>} : memref<16x128xf32, #tpu.memory_space<vmem>>, vector<16x128xf32>,
    return
  }
  func.func @transform_0(%arg0: i32) -> (i32, i32) {
    %c0_i32 = arith.constant 0 : i32
    %c0_i32_0 = arith.constant 0 : i32
    return %arg0, %c0_i32 : i32, i32
  }
  func.func @transform_1(%arg0: i32) -> (i32, i32) {
    %c0_i32 = arith.constant 0 : i32
    %c0_i32_0 = arith.constant 0 : i32
    return %arg0, %c0_i32 : i32, i32
  }
  func.func @transform_2(%arg0: i32) -> (i32, i32) {
    %c0_i32 = arith.constant 0 : i32
    %c0_i32_0 = arith.constant 0 : i32
    %c0_i32_1 = arith.constant 0 : i32
    return %c0_i32, %c0_i32_0 : i32, i32
  }
  func.func @transform_3(%arg0: i32) -> (i32, i32) {
    %c0_i32 = arith.constant 0 : i32
    %c0_i32_0 = arith.constant 0 : i32
    %c0_i32_1 = arith.constant 0 : i32
    return %c0_i32, %c0_i32_0 : i32, i32
  }
  func.func @transform_4(%arg0: i32) -> (i32, i32) {
    %c0_i32 = arith.constant 0 : i32
    %c0_i32_0 = arith.constant 0 : i32
    %c0_i32_1 = arith.constant 0 : i32
    return %c0_i32, %c0_i32_0 : i32, i32
  }
  func.func @transform_5(%arg0: i32) -> (i32, i32) {
    %c0_i32 = arith.constant 0 : i32
    %c0_i32_0 = arith.constant 0 : i32
    %c0_i32_1 = arith.constant 0 : i32
    return %c0_i32, %c0_i32_0 : i32, i32
  }
  func.func @transform_6(%arg0: i32) -> (i32, i32) {
    %c0_i32 = arith.constant 0 : i32
    %c0_i32_0 = arith.constant 0 : i32
    %c0_i32_1 = arith.constant 0 : i32
    return %c0_i32, %c0_i32_0 : i32, i32
  }
  func.func @transform_7(%arg0: i32) -> (i32, i32) {
    %c0_i32 = arith.constant 0 : i32
    %c0_i32_0 = arith.constant 0 : i32
    return %arg0, %c0_i32 : i32, i32
  }
}

module attributes {stable_mosaic.version = 11 : i64} {
  func.func @_sublayer_connection_kernel(%arg0: i32, %arg1: memref<16x128xf32, #tpu.memory_space<vmem>>, %arg2: memref<16x128xf32, #tpu.memory_space<vmem>>, %arg3: memref<128x128xf32, #tpu.memory_space<vmem>>, %arg4: memref<128x128xf32, #tpu.memory_space<vmem>>, %arg5: memref<1x128xf32, #tpu.memory_space<vmem>>, %arg6: memref<1x128xf32, #tpu.memory_space<vmem>>, %arg7: memref<1x128xf32, #tpu.memory_space<vmem>>, %arg8: memref<16x128xf32, #tpu.memory_space<vmem>>) attributes {dimension_semantics = [#tpu.dimension_semantics<parallel>], iteration_bounds = array<i64: 1>, scalar_prefetch = 0 : i64, scratch_operands = 0 : i64, tpu.core_type = #tpu.core_type<tc>, window_params = [{transform_indices = @transform_0, window_bounds = array<i64: 16, 128>}, {transform_indices = @transform_1, window_bounds = array<i64: 16, 128>}, {pipeline_mode = #tpu.pipeline_mode<synchronous>, transform_indices = @transform_2, window_bounds = array<i64: 128, 128>}, {pipeline_mode = #tpu.pipeline_mode<synchronous>, transform_indices = @transform_3, window_bounds = array<i64: 128, 128>}, {pipeline_mode = #tpu.pipeline_mode<synchronous>, transform_indices = @transform_4, window_bounds = array<i64: 1, 128>}, {pipeline_mode = #tpu.pipeline_mode<synchronous>, transform_indices = @transform_5, window_bounds = array<i64: 1, 128>}, {pipeline_mode = #tpu.pipeline_mode<synchronous>, transform_indices = @transform_6, window_bounds = array<i64: 1, 128>}, {transform_indices = @transform_7, window_bounds = array<i64: 16, 128>}]} {
    %c0 = arith.constant 0 : index
    %c0_0 = arith.constant 0 : index
    %0 = vector.load %arg1[%c0, %c0_0] : memref<16x128xf32, #tpu.memory_space<vmem>>, vector<16x128xf32>
    %c0_1 = arith.constant 0 : index
    %c0_2 = arith.constant 0 : index
    %1 = vector.load %arg3[%c0_1, %c0_2] : memref<128x128xf32, #tpu.memory_space<vmem>>, vector<128x128xf32>
    %cst = arith.constant dense<0.000000e+00> : vector<16x128xf32>
    %2 = tpu.matmul %0, %1, %cst {dimension_numbers = #tpu.dot_dimension_numbers<[1], [0], [0], [1], [0, 0, 1, 1], [], []>} : vector<16x128xf32>, vector<128x128xf32>, vector<16x128xf32> -> vector<16x128xf32>
    %c0_3 = arith.constant 0 : index
    %c0_4 = arith.constant 0 : index
    %3 = vector.load %arg2[%c0_3, %c0_4] : memref<16x128xf32, #tpu.memory_space<vmem>>, vector<16x128xf32>
    %c0_5 = arith.constant 0 : index
    %c0_6 = arith.constant 0 : index
    %4 = vector.load %arg4[%c0_5, %c0_6] : memref<128x128xf32, #tpu.memory_space<vmem>>, vector<128x128xf32>
    %cst_7 = arith.constant dense<0.000000e+00> : vector<16x128xf32>
    %5 = tpu.matmul %3, %4, %cst_7 {dimension_numbers = #tpu.dot_dimension_numbers<[1], [0], [0], [1], [0, 0, 1, 1], [], []>} : vector<16x128xf32>, vector<128x128xf32>, vector<16x128xf32> -> vector<16x128xf32>
    %6 = arith.addf %2, %5 : vector<16x128xf32>
    %7 = arith.addf %0, %6 : vector<16x128xf32>
    %c0_8 = arith.constant 0 : index
    %c0_9 = arith.constant 0 : index
    %8 = vector.load %arg5[%c0_8, %c0_9] : memref<1x128xf32, #tpu.memory_space<vmem>>, vector<1x128xf32>
    %9 = vector.broadcast %8 : vector<1x128xf32> to vector<16x128xf32>
    %10 = arith.addf %7, %9 : vector<16x128xf32>
    %11 = tpu.iota {dimensions = array<i32: 1>} : vector<16x128xi32>
    %c32_i32 = arith.constant 32 : i32
    %12 = vector.broadcast %c32_i32 : i32 to vector<16x128xi32>
    %13 = arith.cmpi slt, %11, %12 : vector<16x128xi32>
    %cst_10 = arith.constant 0.000000e+00 : f32
    %14 = vector.broadcast %cst_10 : f32 to vector<16x128xf32>
    %15 = arith.select %13, %10, %14 : vector<16x128xi1>, vector<16x128xf32>
    %cst_11 = arith.constant dense<0.000000e+00> : vector<16xf32>
    %16 = vector.multi_reduction <add>, %15, %cst_11 [1] : vector<16x128xf32> to vector<16xf32>
    %17 = vector.shape_cast %16 : vector<16xf32> to vector<16x1xf32>
    %cst_12 = arith.constant 3.125000e-02 : f32
    %18 = vector.broadcast %cst_12 : f32 to vector<16x1xf32>
    %19 = arith.mulf %17, %18 : vector<16x1xf32>
    %20 = vector.broadcast %19 : vector<16x1xf32> to vector<16x128xf32>
    %21 = arith.subf %10, %20 : vector<16x128xf32>
    %cst_13 = arith.constant 0.000000e+00 : f32
    %22 = vector.broadcast %cst_13 : f32 to vector<16x128xf32>
    %23 = arith.select %13, %21, %22 : vector<16x128xi1>, vector<16x128xf32>
    %24 = arith.mulf %23, %23 : vector<16x128xf32>
    %cst_14 = arith.constant dense<0.000000e+00> : vector<16xf32>
    %25 = vector.multi_reduction <add>, %24, %cst_14 [1] : vector<16x128xf32> to vector<16xf32>
    %26 = vector.shape_cast %25 : vector<16xf32> to vector<16x1xf32>
    %cst_15 = arith.constant 0.0322580636 : f32
    %27 = vector.broadcast %cst_15 : f32 to vector<16x1xf32>
    %28 = arith.mulf %26, %27 : vector<16x1xf32>
    %29 = math.sqrt %28 : vector<16x1xf32>
    %cst_16 = arith.constant 9.99999997E-7 : f32
    %30 = vector.broadcast %cst_16 : f32 to vector<16x1xf32>
    %31 = arith.addf %29, %30 : vector<16x1xf32>
    %32 = tpu.reciprocal %31 : vector<16x1xf32> -> vector<16x1xf32>
    %c0_17 = arith.constant 0 : index
    %c0_18 = arith.constant 0 : index
    %33 = vector.load %arg6[%c0_17, %c0_18] : memref<1x128xf32, #tpu.memory_space<vmem>>, vector<1x128xf32>
    %34 = vector.broadcast %33 : vector<1x128xf32> to vector<16x128xf32>
    %35 = vector.broadcast %32 : vector<16x1xf32> to vector<16x128xf32>
    %36 = arith.mulf %34, %35 : vector<16x128xf32>
    %37 = arith.mulf %36, %21 : vector<16x128xf32>
    %c0_19 = arith.constant 0 : index
    %c0_20 = arith.constant 0 : index
    %38 = vector.load %arg7[%c0_19, %c0_20] : memref<1x128xf32, #tpu.memory_space<vmem>>, vector<1x128xf32>
    %39 = vector.broadcast %38 : vector<1x128xf32> to vector<16x128xf32>
    %40 = arith.addf %37, %39 : vector<16x128xf32>
    %c0_21 = arith.constant 0 : index
    %c0_22 = arith.constant 0 : index
    %41 = vector.load %arg8[%c0_21, %c0_22] : memref<16x128xf32, #tpu.memory_space<vmem>>, vector<16x128xf32>
    tpu.vector_store %arg8[%c0_21, %c0_22], %40 {strides = array<i32>} : memref<16x128xf32, #tpu.memory_space<vmem>>, vector<16x128xf32>,
    return
  }
  func.func @transform_0(%arg0: i32) -> (i32, i32) {
    %c0_i32 = arith.constant 0 : i32
    %c0_i32_0 = arith.constant 0 : i32
    return %arg0, %c0_i32 : i32, i32
  }
  func.func @transform_1(%arg0: i32) -> (i32, i32) {
    %c0_i32 = arith.constant 0 : i32
    %c0_i32_0 = arith.constant 0 : i32
    return %arg0, %c0_i32 : i32, i32
  }
  func.func @transform_2(%arg0: i32) -> (i32, i32) {
    %c0_i32 = arith.constant 0 : i32
    %c0_i32_0 = arith.constant 0 : i32
    %c0_i32_1 = arith.constant 0 : i32
    return %c0_i32, %c0_i32_0 : i32, i32
  }
  func.func @transform_3(%arg0: i32) -> (i32, i32) {
    %c0_i32 = arith.constant 0 : i32
    %c0_i32_0 = arith.constant 0 : i32
    %c0_i32_1 = arith.constant 0 : i32
    return %c0_i32, %c0_i32_0 : i32, i32
  }
  func.func @transform_4(%arg0: i32) -> (i32, i32) {
    %c0_i32 = arith.constant 0 : i32
    %c0_i32_0 = arith.constant 0 : i32
    %c0_i32_1 = arith.constant 0 : i32
    return %c0_i32, %c0_i32_0 : i32, i32
  }
  func.func @transform_5(%arg0: i32) -> (i32, i32) {
    %c0_i32 = arith.constant 0 : i32
    %c0_i32_0 = arith.constant 0 : i32
    %c0_i32_1 = arith.constant 0 : i32
    return %c0_i32, %c0_i32_0 : i32, i32
  }
  func.func @transform_6(%arg0: i32) -> (i32, i32) {
    %c0_i32 = arith.constant 0 : i32
    %c0_i32_0 = arith.constant 0 : i32
    %c0_i32_1 = arith.constant 0 : i32
    return %c0_i32, %c0_i32_0 : i32, i32
  }
  func.func @transform_7(%arg0: i32) -> (i32, i32) {
    %c0_i32 = arith.constant 0 : i32
    %c0_i32_0 = arith.constant 0 : i32
    return %arg0, %c0_i32 : i32, i32
  }
}

</mosaic_0001>

<llo_original>
// kernel: tpu_custom_call.1
$region0: #{tpu_custom_call.1}
  #allocation0 [shape = 'u32[]', space=smem, size = 0x4, offset = 0x4, fixed_abs, tag = 'smem constant byte address 0x4 - core index']
  #allocation1 [shape = 'u32[144,128]{1,0:T(1,128)}', space=vmem, size = 0x12000, scoped, tag = 'internal scratch']
  %s0 = inlined_call_operand.hbm [shape: f32[16,128], index: 0, kind: input, shape index: {}]
  %s1 = inlined_call_operand.hbm [shape: f32[16,128], index: 1, kind: input, shape index: {}]
  %s2 = inlined_call_operand.hbm [shape: f32[128,128], index: 2, kind: input, shape index: {}]
  %s3 = inlined_call_operand.hbm [shape: f32[128,128], index: 3, kind: input, shape index: {}]
  %s4 = inlined_call_operand.vmem [shape: f32[1,128], index: 4, kind: input, shape index: {}]
  %s5 = inlined_call_operand.vmem [shape: f32[1,128], index: 5, kind: input, shape index: {}]
  %s6 = inlined_call_operand.vmem [shape: f32[1,128], index: 6, kind: input, shape index: {}]
  %s7 = inlined_call_operand.hbm [shape: f32[16,128], index: 7, kind: output, shape index: {}]
  %s8 = sld [smem:[#allocation0]]
  $region54: #{tpu_custom_call.1} parent=0
    _
  %s10 = ssub.s32 1, %s8
  %s11 = scalar_select 0, %s10, %s8
  $region1: #{tpu_custom_call.1} parent=0
    #allocation2 [shape = 'u8[8192]{0}', space=vmem, size = 0x2000, scoped, tag = 'input window, operand 0, single buffered']
    #allocation3 [shape = 's32[1]{0}', space=sflag, size = 0x4, scoped, tag = 'scoped memory for tpu_custom_call.1']
    #allocation4 [shape = 's32[1]{0}', space=sflag, size = 0x4, scoped, tag = 'scoped memory for tpu_custom_call.1']
    #allocation5 [shape = 'u8[8192]{0}', space=vmem, size = 0x2000, scoped, tag = 'input window, operand 1, single buffered']
    #allocation6 [shape = 's32[1]{0}', space=sflag, size = 0x4, scoped, tag = 'scoped memory for tpu_custom_call.1']
    #allocation7 [shape = 'u8[65536]{0}', space=vmem, size = 0x10000, scoped, tag = 'input window, operand 2, single buffered']
    #allocation8 [shape = 'u8[65536]{0}', space=vmem, size = 0x10000, scoped, tag = 'input window, operand 3, single buffered']
    #allocation9 [shape = 's32[1]{0}', space=sflag, size = 0x4, scoped, tag = 'scoped memory for tpu_custom_call.1']
    #allocation10 [shape = 'u8[8192]{0}', space=vmem, size = 0x2000, scoped, tag = 'output window, operand 0, single buffered']
    %12 = vsyncpa [#allocation3], 0
    %13 = vsyncpa [#allocation6], 0
    %14 = vsyncpa [#allocation9], 0
    %15 = vsyncpa [#allocation4], 0
    // Predicated region
    $region2: #{tpu_custom_call.1} parent=1 // pred_check
      _
    $region3: #{tpu_custom_call.1} parent=1 // pred_check_branch
      %17 = sbr.rel (0) target = $region5
    $region4: #{tpu_custom_call.1} parent=1 // pred_region
      %s19 = ssub.s32 256, 256
      %20 = vsyncadd [#allocation3], %s19
      %s21 = sshll.u32 [#allocation2], 4
      %s22 = int_to_ptr.vmem [resolvable:$true] %s21
      %27 = dma.hbm_to_vmem [thread:$0]  %s0, 256, %s22, [#allocation3], 128, 128, 8
    $region5: #{tpu_custom_call.1} parent=1 // pred_fallthru
      _
    // Predicated region
    $region6: #{tpu_custom_call.1} parent=1 // pred_check
      _
    $region7: #{tpu_custom_call.1} parent=1 // pred_check_branch
      %29 = sbr.rel (0) target = $region9
    $region8: #{tpu_custom_call.1} parent=1 // pred_region
      %s31 = ssub.s32 256, 256
      %32 = vsyncadd [#allocation6], %s31
      %s33 = sshll.u32 [#allocation5], 4
      %s34 = int_to_ptr.vmem [resolvable:$true] %s33
      %39 = dma.hbm_to_vmem [thread:$0]  %s1, 256, %s34, [#allocation6], 128, 128, 8
    $region9: #{tpu_custom_call.1} parent=1 // pred_fallthru
      _
    // Predicated region
    $region10: #{tpu_custom_call.1} parent=1 // pred_check
      _
    $region11: #{tpu_custom_call.1} parent=1 // pred_check_branch
      %41 = sbr.rel (0) target = $region13
    $region12: #{tpu_custom_call.1} parent=1 // pred_region
      %s43 = ssub.s32 2048, 2048
      %44 = vsyncadd [#allocation6], %s43
      %s45 = sshll.u32 [#allocation7], 4
      %s46 = int_to_ptr.vmem [resolvable:$true] %s45
      %51 = dma.hbm_to_vmem [thread:$0]  %s2, 2048, %s46, [#allocation6], 128, 128, 8
    $region13: #{tpu_custom_call.1} parent=1 // pred_fallthru
      _
    // Predicated region
    $region14: #{tpu_custom_call.1} parent=1 // pred_check
      _
    $region15: #{tpu_custom_call.1} parent=1 // pred_check_branch
      %53 = sbr.rel (0) target = $region17
    $region16: #{tpu_custom_call.1} parent=1 // pred_region
      %s55 = ssub.s32 2048, 2048
      %56 = vsyncadd [#allocation9], %s55
      %s57 = sshll.u32 [#allocation8], 4
      %s58 = int_to_ptr.vmem [resolvable:$true] %s57
      %63 = dma.hbm_to_vmem [thread:$0]  %s3, 2048, %s58, [#allocation9], 128, 128, 8
    $region17: #{tpu_custom_call.1} parent=1 // pred_fallthru
      _
    // Predicated region
    $region18: #{tpu_custom_call.1} parent=1 // pred_check
      _
    $region19: #{tpu_custom_call.1} parent=1 // pred_check_branch
      %65 = sbr.rel (0) target = $region21
    $region20: #{tpu_custom_call.1} parent=1 // pred_region
      _
    $region21: #{tpu_custom_call.1} parent=1 // pred_fallthru
      _
    // Predicated region
    $region22: #{tpu_custom_call.1} parent=1 // pred_check
      _
    $region23: #{tpu_custom_call.1} parent=1 // pred_check_branch
      %67 = sbr.rel (0) target = $region25
    $region24: #{tpu_custom_call.1} parent=1 // pred_region
      _
    $region25: #{tpu_custom_call.1} parent=1 // pred_fallthru
      _
    // Predicated region
    $region26: #{tpu_custom_call.1} parent=1 // pred_check
      _
    $region27: #{tpu_custom_call.1} parent=1 // pred_check_branch
      %69 = sbr.rel (0) target = $region29
    $region28: #{tpu_custom_call.1} parent=1 // pred_region
      _
    $region29: #{tpu_custom_call.1} parent=1 // pred_fallthru
      _
    // Predicated region
    $region30: #{tpu_custom_call.1} parent=1 // pred_check
      _
    $region31: #{tpu_custom_call.1} parent=1 // pred_check_branch
      %71 = sbr.rel (0) target = $region33
    $region32: #{tpu_custom_call.1} parent=1 // pred_region
      %72 = dma.done [#allocation3], 256
    $region33: #{tpu_custom_call.1} parent=1 // pred_fallthru
      _
    // Predicated region
    $region34: #{tpu_custom_call.1} parent=1 // pred_check
      _
    $region35: #{tpu_custom_call.1} parent=1 // pred_check_branch
      %74 = sbr.rel (0) target = $region37
    $region36: #{tpu_custom_call.1} parent=1 // pred_region
      %75 = dma.done [#allocation6], 256
    $region37: #{tpu_custom_call.1} parent=1 // pred_fallthru
      _
    // Predicated region
    $region38: #{tpu_custom_call.1} parent=1 // pred_check
      _
    $region39: #{tpu_custom_call.1} parent=1 // pred_check_branch
      %77 = sbr.rel (0) target = $region41
    $region40: #{tpu_custom_call.1} parent=1 // pred_region
      %78 = dma.done [#allocation6], 2048
    $region41: #{tpu_custom_call.1} parent=1 // pred_fallthru
      _
    // Predicated region
    $region42: #{tpu_custom_call.1} parent=1 // pred_check
      _
    $region43: #{tpu_custom_call.1} parent=1 // pred_check_branch
      %80 = sbr.rel (0) target = $region45
    $region44: #{tpu_custom_call.1} parent=1 // pred_region
      %81 = dma.done [#allocation9], 2048
    $region45: #{tpu_custom_call.1} parent=1 // pred_fallthru
      _
    %v82 = vld [vmem:[#allocation2] sm:$0xff]
    %v83 = vld [vmem:[#allocation2 + $0x8] sm:$0xff]
    %v84 = vld [vmem:[#allocation7] sm:$0xff]
    %v85 = vld [vmem:[#allocation7 + $0x8] sm:$0xff]
    %v86 = vld [vmem:[#allocation7 + $0x10] sm:$0xff]
    %v87 = vld [vmem:[#allocation7 + $0x18] sm:$0xff]
    %v88 = vld [vmem:[#allocation7 + $0x20] sm:$0xff]
    %v89 = vld [vmem:[#allocation7 + $0x28] sm:$0xff]
    %v90 = vld [vmem:[#allocation7 + $0x30] sm:$0xff]
    %v91 = vld [vmem:[#allocation7 + $0x38] sm:$0xff]
    %v92 = vld [vmem:[#allocation7 + $0x40] sm:$0xff]
    %v93 = vld [vmem:[#allocation7 + $0x48] sm:$0xff]
    %v94 = vld [vmem:[#allocation7 + $0x50] sm:$0xff]
    %v95 = vld [vmem:[#allocation7 + $0x58] sm:$0xff]
    %v96 = vld [vmem:[#allocation7 + $0x60] sm:$0xff]
    %v97 = vld [vmem:[#allocation7 + $0x68] sm:$0xff]
    %v98 = vld [vmem:[#allocation7 + $0x70] sm:$0xff]
    %v99 = vld [vmem:[#allocation7 + $0x78] sm:$0xff]
    %v100 = vld [vmem:[#allocation5] sm:$0xff]
    %v101 = vld [vmem:[#allocation5 + $0x8] sm:$0xff]
    %v102 = vld [vmem:[#allocation8] sm:$0xff]
    %v103 = vld [vmem:[#allocation8 + $0x8] sm:$0xff]
    %v104 = vld [vmem:[#allocation8 + $0x10] sm:$0xff]
    %v105 = vld [vmem:[#allocation8 + $0x18] sm:$0xff]
    %v106 = vld [vmem:[#allocation8 + $0x20] sm:$0xff]
    %v107 = vld [vmem:[#allocation8 + $0x28] sm:$0xff]
    %v108 = vld [vmem:[#allocation8 + $0x30] sm:$0xff]
    %v109 = vld [vmem:[#allocation8 + $0x38] sm:$0xff]
    %v110 = vld [vmem:[#allocation8 + $0x40] sm:$0xff]
    %v111 = vld [vmem:[#allocation8 + $0x48] sm:$0xff]
    %v112 = vld [vmem:[#allocation8 + $0x50] sm:$0xff]
    %v113 = vld [vmem:[#allocation8 + $0x58] sm:$0xff]
    %v114 = vld [vmem:[#allocation8 + $0x60] sm:$0xff]
    %v115 = vld [vmem:[#allocation8 + $0x68] sm:$0xff]
    %v116 = vld [vmem:[#allocation8 + $0x70] sm:$0xff]
    %v117 = vld [vmem:[#allocation8 + $0x78] sm:$0xff]
    %118 = vmatprep.subr.mxu0 0.0
    %119 = vmatpush1.msra.mxu0 %v117
    %120 = vmatprep.subr.mxu0 0.0
    %121 = vmatpush1.msra.mxu0 %v116
    %122 = vmatprep.subr.mxu0 0.0
    %123 = vmatpush1.msra.mxu0 %v115
    %124 = vmatprep.subr.mxu0 0.0
    %125 = vmatpush1.msra.mxu0 %v114
    %126 = vmatprep.subr.mxu0 0.0
    %127 = vmatpush1.msra.mxu0 %v113
    %128 = vmatprep.subr.mxu0 0.0
    %129 = vmatpush1.msra.mxu0 %v112
    %130 = vmatprep.subr.mxu0 0.0
    %131 = vmatpush1.msra.mxu0 %v111
    %132 = vmatprep.subr.mxu0 0.0
    %133 = vmatpush1.msra.mxu0 %v110
    %134 = vmatprep.subr.mxu0 0.0
    %135 = vmatpush1.msra.mxu0 %v109
    %136 = vmatprep.subr.mxu0 0.0
    %137 = vmatpush1.msra.mxu0 %v108
    %138 = vmatprep.subr.mxu0 0.0
    %139 = vmatpush1.msra.mxu0 %v107
    %140 = vmatprep.subr.mxu0 0.0
    %141 = vmatpush1.msra.mxu0 %v106
    %142 = vmatprep.subr.mxu0 0.0
    %143 = vmatpush1.msra.mxu0 %v105
    %144 = vmatprep.subr.mxu0 0.0
    %145 = vmatpush1.msra.mxu0 %v104
    %146 = vmatprep.subr.mxu0 0.0
    %147 = vmatpush1.msra.mxu0 %v103
    %148 = vmatprep.subr.mxu0 0.0
    %149 = vmatpush1.msra.mxu0 %v102
    %150 = vmatprep.subr.mxu0 0.0
    %151 = vmatpush2.msra.mxu0 0.0
    %152 = vmatprep.subr.mxu0 0.0
    %153 = vmatpush2.msra.mxu0 0.0
    %154 = vmatprep.subr.mxu0 0.0
    %155 = vmatpush2.msra.mxu0 0.0
    %156 = vmatprep.subr.mxu0 0.0
    %157 = vmatpush2.msra.mxu0 0.0
    %158 = vmatprep.subr.mxu0 0.0
    %159 = vmatpush2.msra.mxu0 0.0
    %160 = vmatprep.subr.mxu0 0.0
    %161 = vmatpush2.msra.mxu0 0.0
    %162 = vmatprep.subr.mxu0 0.0
    %163 = vmatpush2.msra.mxu0 0.0
    %164 = vmatprep.subr.mxu0 0.0
    %165 = vmatpush2.msra.mxu0 0.0
    %166 = vmatprep.subr.mxu0 0.0
    %167 = vmatpush2.msra.mxu0 0.0
    %168 = vmatprep.subr.mxu0 0.0
    %169 = vmatpush2.msra.mxu0 0.0
    %170 = vmatprep.subr.mxu0 0.0
    %171 = vmatpush2.msra.mxu0 0.0
    %172 = vmatprep.subr.mxu0 0.0
    %173 = vmatpush2.msra.mxu0 0.0
    %174 = vmatprep.subr.mxu0 0.0
    %175 = vmatpush2.msra.mxu0 0.0
    %176 = vmatprep.subr.mxu0 0.0
    %177 = vmatpush2.msra.mxu0 0.0
    %178 = vmatprep.subr.mxu0 0.0
    %179 = vmatpush2.msra.mxu0 0.0
    %180 = vmatprep.subr.mxu0 0.0
    %181 = vmatpush2.msra.mxu0 0.0
    %182 = vmatprep.mubr.f32.mxu0 0.0
    %183 = vmatmul.mubr.f32.gmra.mxu0 %v100
    %v184 = vpop.f32.mrf.mxu0
    %v185 = vadd.f32 0.0, %v184
    %v186 = vpop.f32.mrf.mxu0
    %187 = vmatprep.mubr.f32.mxu0 0.0
    %188 = vmatmul.mubr.f32.gmra.mxu0 %v101
    %v189 = vpop.f32.mrf.mxu0
    %v190 = vadd.f32 0.0, %v189
    %v191 = vpop.f32.mrf.mxu0
    %192 = vdwg.mxu0
    %193 = vmatprep.subr.mxu0 0.0
    %194 = vmatpush1.msra.mxu0 %v99
    %195 = vmatprep.subr.mxu0 0.0
    %196 = vmatpush1.msra.mxu0 %v98
    %197 = vmatprep.subr.mxu0 0.0
    %198 = vmatpush1.msra.mxu0 %v97
    %199 = vmatprep.subr.mxu0 0.0
    %200 = vmatpush1.msra.mxu0 %v96
    %201 = vmatprep.subr.mxu0 0.0
    %202 = vmatpush1.msra.mxu0 %v95
    %203 = vmatprep.subr.mxu0 0.0
    %204 = vmatpush1.msra.mxu0 %v94
    %205 = vmatprep.subr.mxu0 0.0
    %206 = vmatpush1.msra.mxu0 %v93
    %207 = vmatprep.subr.mxu0 0.0
    %208 = vmatpush1.msra.mxu0 %v92
    %209 = vmatprep.subr.mxu0 0.0
    %210 = vmatpush1.msra.mxu0 %v91
    %211 = vmatprep.subr.mxu0 0.0
    %212 = vmatpush1.msra.mxu0 %v90
    %213 = vmatprep.subr.mxu0 0.0
    %214 = vmatpush1.msra.mxu0 %v89
    %215 = vmatprep.subr.mxu0 0.0
    %216 = vmatpush1.msra.mxu0 %v88
    %217 = vmatprep.subr.mxu0 0.0
    %218 = vmatpush1.msra.mxu0 %v87
    %219 = vmatprep.subr.mxu0 0.0
    %220 = vmatpush1.msra.mxu0 %v86
    %221 = vmatprep.subr.mxu0 0.0
    %222 = vmatpush1.msra.mxu0 %v85
    %223 = vmatprep.subr.mxu0 0.0
    %224 = vmatpush1.msra.mxu0 %v84
    %225 = vmatprep.subr.mxu0 0.0
    %226 = vmatpush2.msra.mxu0 0.0
    %227 = vmatprep.subr.mxu0 0.0
    %228 = vmatpush2.msra.mxu0 0.0
    %229 = vmatprep.subr.mxu0 0.0
    %230 = vmatpush2.msra.mxu0 0.0
    %231 = vmatprep.subr.mxu0 0.0
    %232 = vmatpush2.msra.mxu0 0.0
    %233 = vmatprep.subr.mxu0 0.0
    %234 = vmatpush2.msra.mxu0 0.0
    %235 = vmatprep.subr.mxu0 0.0
    %236 = vmatpush2.msra.mxu0 0.0
    %237 = vmatprep.subr.mxu0 0.0
    %238 = vmatpush2.msra.mxu0 0.0
    %239 = vmatprep.subr.mxu0 0.0
    %240 = vmatpush2.msra.mxu0 0.0
    %241 = vmatprep.subr.mxu0 0.0
    %242 = vmatpush2.msra.mxu0 0.0
    %243 = vmatprep.subr.mxu0 0.0
    %244 = vmatpush2.msra.mxu0 0.0
    %245 = vmatprep.subr.mxu0 0.0
    %246 = vmatpush2.msra.mxu0 0.0
    %247 = vmatprep.subr.mxu0 0.0
    %248 = vmatpush2.msra.mxu0 0.0
    %249 = vmatprep.subr.mxu0 0.0
    %250 = vmatpush2.msra.mxu0 0.0
    %251 = vmatprep.subr.mxu0 0.0
    %252 = vmatpush2.msra.mxu0 0.0
    %253 = vmatprep.subr.mxu0 0.0
    %254 = vmatpush2.msra.mxu0 0.0
    %255 = vmatprep.subr.mxu0 0.0
    %256 = vmatpush2.msra.mxu0 0.0
    %257 = vmatprep.mubr.f32.mxu0 0.0
    %258 = vmatmul.mubr.f32.gmra.mxu0 %v82
    %v259 = vpop.f32.mrf.mxu0
    %v260 = vadd.f32 %v185, %v259
    %v261 = vpop.f32.mrf.mxu0
    %262 = vmatprep.mubr.f32.mxu0 0.0
    %263 = vmatmul.mubr.f32.gmra.mxu0 %v83
    %v264 = vpop.f32.mrf.mxu0
    %v265 = vadd.f32 %v190, %v264
    %v266 = vpop.f32.mrf.mxu0
    %267 = vdwg.mxu0
    %v268 = vadd.f32 %v82, %v260
    %v269 = vadd.f32 %v83, %v265
    %v270 = vld [vmem:[%s4] sm:$0x1]
    %v272 = vlaneseq
    %v273 = vshrl.u32 %v272, 7
    %v274 = vsub.s32 0, %v273
    %v275 = vrot.slane %v270, %v274
    %v277 = vadd.f32 %v268, %v275
    %v278 = vadd.f32 %v269, %v275
    %v279 = vlaneseq
    %v280 = vand.u32 %v279, 127
    %vm281 = vcmp.lt.s32.totalorder %v280, 32
    %v282 = vsel %vm281, %v277, 0.0
    %v283 = vsel %vm281, %v278, 0.0
    %284 = vadd.xlane.f32.xlu0 %v282
    %v285 = vpop.xlane.xlu0 %284
    %286 = vadd.xlane.f32.xlu0 %v283
    %v287 = vpop.xlane.xlu0 %286
    %v288 = vmul.f32 %v285, 0.03125
    %v289 = vmul.f32 %v287, 0.03125
    %v290 = vsub.f32 %v277, %v288
    %v291 = vsub.f32 %v278, %v289
    %v292 = vsel %vm281, %v290, 0.0
    %v293 = vsel %vm281, %v291, 0.0
    %v294 = vmul.f32 %v292, %v292
    %v295 = vmul.f32 %v293, %v293
    %296 = vadd.xlane.f32.xlu0 %v294
    %v297 = vpop.xlane.xlu0 %296
    %298 = vadd.xlane.f32.xlu0 %v295
    %v299 = vpop.xlane.xlu0 %298
    %v300 = vmul.f32 %v297, 0.032258064
    %v301 = vmul.f32 %v299, 0.032258064
    %v302 = vrsqrt.pop %v300
    %v303 = vmul.f32 %v300, %v302
    %vm304 = vcmp.eq.f32.partialorder %v300, inf
    %v305 = vsel %vm304, %v300, %v303
    %vm306 = vcmp.eq.f32.partialorder %v300, 0.0
    %v307 = vand.u32 %v300, 2147483648
    %v308 = vsel %vm306, %v307, %v305
    %v309 = vrsqrt.pop %v301
    %v310 = vmul.f32 %v301, %v309
    %vm311 = vcmp.eq.f32.partialorder %v301, inf
    %v312 = vsel %vm311, %v301, %v310
    %vm313 = vcmp.eq.f32.partialorder %v301, 0.0
    %v314 = vand.u32 %v301, 2147483648
    %v315 = vsel %vm313, %v314, %v312
    %v316 = vadd.f32 %v308, 1e-06
    %v317 = vadd.f32 %v315, 1e-06
    %v318 = vrcp.pop %v316
    %v319 = vrcp.pop %v317
    %v320 = vld [vmem:[%s5] sm:$0x1]
    %v322 = vlaneseq
    %v323 = vshrl.u32 %v322, 7
    %v324 = vsub.s32 0, %v323
    %v325 = vrot.slane %v320, %v324
    %v327 = vmul.f32 %v325, %v318
    %v328 = vmul.f32 %v325, %v319
    %v329 = vmul.f32 %v327, %v290
    %v330 = vmul.f32 %v328, %v291
    %v331 = vld [vmem:[%s6] sm:$0x1]
    %v333 = vlaneseq
    %v334 = vshrl.u32 %v333, 7
    %v335 = vsub.s32 0, %v334
    %v336 = vrot.slane %v331, %v335
    %v338 = vadd.f32 %v329, %v336
    %v339 = vadd.f32 %v330, %v336
    %340 = vst [vmem:[#allocation10] sm:$0xff] %v338
    %341 = vst [vmem:[#allocation10 + $0x8] sm:$0xff] %v339
    // Predicated region
    $region46: #{tpu_custom_call.1} parent=1 // pred_check
      _
    $region47: #{tpu_custom_call.1} parent=1 // pred_check_branch
      %343 = sbr.rel (0) target = $region49
    $region48: #{tpu_custom_call.1} parent=1 // pred_region
      %s345 = ssub.s32 256, 256
      %346 = vsyncadd [#allocation4], %s345
      %s347 = sshll.u32 [#allocation10], 4
      %s348 = int_to_ptr.vmem [resolvable:$true] %s347
      %353 = dma.vmem_to_hbm [thread:$0]  %s348, 256, %s7, [#allocation4], 128, 128, 8
    $region49: #{tpu_custom_call.1} parent=1 // pred_fallthru
      _
    // Predicated region
    $region50: #{tpu_custom_call.1} parent=1 // pred_check
      _
    $region51: #{tpu_custom_call.1} parent=1 // pred_check_branch
      %355 = sbr.rel (0) target = $region53
    $region52: #{tpu_custom_call.1} parent=1 // pred_region
      %356 = dma.done [#allocation4], 256
    $region53: #{tpu_custom_call.1} parent=1 // pred_fallthru
      _
    %357 = vsyncpa [#allocation3], 1
    %358 = vsyncpa [#allocation6], 1
    %359 = vsyncpa [#allocation9], 1
    %360 = vsyncpa [#allocation4], 1

// kernel: tpu_custom_call.1
$region0: #{tpu_custom_call.1}
  #allocation0 [shape = 'u32[]', space=smem, size = 0x4, offset = 0x4, fixed_abs, tag = 'smem constant byte address 0x4 - core index']
  #allocation1 [shape = 'u32[144,128]{1,0:T(1,128)}', space=vmem, size = 0x12000, scoped, tag = 'internal scratch']
  %s0 = inlined_call_operand.hbm [shape: f32[16,128], index: 0, kind: input, shape index: {}]
  %s1 = inlined_call_operand.hbm [shape: f32[16,128], index: 1, kind: input, shape index: {}]
  %s2 = inlined_call_operand.hbm [shape: f32[128,128], index: 2, kind: input, shape index: {}]
  %s3 = inlined_call_operand.hbm [shape: f32[128,128], index: 3, kind: input, shape index: {}]
  %s4 = inlined_call_operand.vmem [shape: f32[1,128], index: 4, kind: input, shape index: {}]
  %s5 = inlined_call_operand.vmem [shape: f32[1,128], index: 5, kind: input, shape index: {}]
  %s6 = inlined_call_operand.vmem [shape: f32[1,128], index: 6, kind: input, shape index: {}]
  %s7 = inlined_call_operand.hbm [shape: f32[16,128], index: 7, kind: output, shape index: {}]
  %s8 = sld [smem:[#allocation0]]
  $region54: #{tpu_custom_call.1} parent=0
    _
  %s10 = ssub.s32 1, %s8
  %s11 = scalar_select 0, %s10, %s8
  $region1: #{tpu_custom_call.1} parent=0
    #allocation2 [shape = 'u8[8192]{0}', space=vmem, size = 0x2000, scoped, tag = 'input window, operand 0, single buffered']
    #allocation3 [shape = 's32[1]{0}', space=sflag, size = 0x4, scoped, tag = 'scoped memory for tpu_custom_call.1']
    #allocation4 [shape = 's32[1]{0}', space=sflag, size = 0x4, scoped, tag = 'scoped memory for tpu_custom_call.1']
    #allocation5 [shape = 'u8[8192]{0}', space=vmem, size = 0x2000, scoped, tag = 'input window, operand 1, single buffered']
    #allocation6 [shape = 's32[1]{0}', space=sflag, size = 0x4, scoped, tag = 'scoped memory for tpu_custom_call.1']
    #allocation7 [shape = 'u8[65536]{0}', space=vmem, size = 0x10000, scoped, tag = 'input window, operand 2, single buffered']
    #allocation8 [shape = 'u8[65536]{0}', space=vmem, size = 0x10000, scoped, tag = 'input window, operand 3, single buffered']
    #allocation9 [shape = 's32[1]{0}', space=sflag, size = 0x4, scoped, tag = 'scoped memory for tpu_custom_call.1']
    #allocation10 [shape = 'u8[8192]{0}', space=vmem, size = 0x2000, scoped, tag = 'output window, operand 0, single buffered']
    %12 = vsyncpa [#allocation3], 0
    %13 = vsyncpa [#allocation6], 0
    %14 = vsyncpa [#allocation9], 0
    %15 = vsyncpa [#allocation4], 0
    // Predicated region
    $region2: #{tpu_custom_call.1} parent=1 // pred_check
      _
    $region3: #{tpu_custom_call.1} parent=1 // pred_check_branch
      %17 = sbr.rel (0) target = $region5
    $region4: #{tpu_custom_call.1} parent=1 // pred_region
      %s19 = ssub.s32 256, 256
      %20 = vsyncadd [#allocation3], %s19
      %s21 = sshll.u32 [#allocation2], 4
      %s22 = int_to_ptr.vmem [resolvable:$true] %s21
      %27 = dma.hbm_to_vmem [thread:$0]  %s0, 256, %s22, [#allocation3], 128, 128, 8
    $region5: #{tpu_custom_call.1} parent=1 // pred_fallthru
      _
    // Predicated region
    $region6: #{tpu_custom_call.1} parent=1 // pred_check
      _
    $region7: #{tpu_custom_call.1} parent=1 // pred_check_branch
      %29 = sbr.rel (0) target = $region9
    $region8: #{tpu_custom_call.1} parent=1 // pred_region
      %s31 = ssub.s32 256, 256
      %32 = vsyncadd [#allocation6], %s31
      %s33 = sshll.u32 [#allocation5], 4
      %s34 = int_to_ptr.vmem [resolvable:$true] %s33
      %39 = dma.hbm_to_vmem [thread:$0]  %s1, 256, %s34, [#allocation6], 128, 128, 8
    $region9: #{tpu_custom_call.1} parent=1 // pred_fallthru
      _
    // Predicated region
    $region10: #{tpu_custom_call.1} parent=1 // pred_check
      _
    $region11: #{tpu_custom_call.1} parent=1 // pred_check_branch
      %41 = sbr.rel (0) target = $region13
    $region12: #{tpu_custom_call.1} parent=1 // pred_region
      %s43 = ssub.s32 2048, 2048
      %44 = vsyncadd [#allocation6], %s43
      %s45 = sshll.u32 [#allocation7], 4
      %s46 = int_to_ptr.vmem [resolvable:$true] %s45
      %51 = dma.hbm_to_vmem [thread:$0]  %s2, 2048, %s46, [#allocation6], 128, 128, 8
    $region13: #{tpu_custom_call.1} parent=1 // pred_fallthru
      _
    // Predicated region
    $region14: #{tpu_custom_call.1} parent=1 // pred_check
      _
    $region15: #{tpu_custom_call.1} parent=1 // pred_check_branch
      %53 = sbr.rel (0) target = $region17
    $region16: #{tpu_custom_call.1} parent=1 // pred_region
      %s55 = ssub.s32 2048, 2048
      %56 = vsyncadd [#allocation9], %s55
      %s57 = sshll.u32 [#allocation8], 4
      %s58 = int_to_ptr.vmem [resolvable:$true] %s57
      %63 = dma.hbm_to_vmem [thread:$0]  %s3, 2048, %s58, [#allocation9], 128, 128, 8
    $region17: #{tpu_custom_call.1} parent=1 // pred_fallthru
      _
    // Predicated region
    $region18: #{tpu_custom_call.1} parent=1 // pred_check
      _
    $region19: #{tpu_custom_call.1} parent=1 // pred_check_branch
      %65 = sbr.rel (0) target = $region21
    $region20: #{tpu_custom_call.1} parent=1 // pred_region
      _
    $region21: #{tpu_custom_call.1} parent=1 // pred_fallthru
      _
    // Predicated region
    $region22: #{tpu_custom_call.1} parent=1 // pred_check
      _
    $region23: #{tpu_custom_call.1} parent=1 // pred_check_branch
      %67 = sbr.rel (0) target = $region25
    $region24: #{tpu_custom_call.1} parent=1 // pred_region
      _
    $region25: #{tpu_custom_call.1} parent=1 // pred_fallthru
      _
    // Predicated region
    $region26: #{tpu_custom_call.1} parent=1 // pred_check
      _
    $region27: #{tpu_custom_call.1} parent=1 // pred_check_branch
      %69 = sbr.rel (0) target = $region29
    $region28: #{tpu_custom_call.1} parent=1 // pred_region
      _
    $region29: #{tpu_custom_call.1} parent=1 // pred_fallthru
      _
    // Predicated region
    $region30: #{tpu_custom_call.1} parent=1 // pred_check
      _
    $region31: #{tpu_custom_call.1} parent=1 // pred_check_branch
      %71 = sbr.rel (0) target = $region33
    $region32: #{tpu_custom_call.1} parent=1 // pred_region
      %72 = dma.done [#allocation3], 256
    $region33: #{tpu_custom_call.1} parent=1 // pred_fallthru
      _
    // Predicated region
    $region34: #{tpu_custom_call.1} parent=1 // pred_check
      _
    $region35: #{tpu_custom_call.1} parent=1 // pred_check_branch
      %74 = sbr.rel (0) target = $region37
    $region36: #{tpu_custom_call.1} parent=1 // pred_region
      %75 = dma.done [#allocation6], 256
    $region37: #{tpu_custom_call.1} parent=1 // pred_fallthru
      _
    // Predicated region
    $region38: #{tpu_custom_call.1} parent=1 // pred_check
      _
    $region39: #{tpu_custom_call.1} parent=1 // pred_check_branch
      %77 = sbr.rel (0) target = $region41
    $region40: #{tpu_custom_call.1} parent=1 // pred_region
      %78 = dma.done [#allocation6], 2048
    $region41: #{tpu_custom_call.1} parent=1 // pred_fallthru
      _
    // Predicated region
    $region42: #{tpu_custom_call.1} parent=1 // pred_check
      _
    $region43: #{tpu_custom_call.1} parent=1 // pred_check_branch
      %80 = sbr.rel (0) target = $region45
    $region44: #{tpu_custom_call.1} parent=1 // pred_region
      %81 = dma.done [#allocation9], 2048
    $region45: #{tpu_custom_call.1} parent=1 // pred_fallthru
      _
    %v82 = vld [vmem:[#allocation2] sm:$0xff]
    %v83 = vld [vmem:[#allocation2 + $0x8] sm:$0xff]
    %v84 = vld [vmem:[#allocation7] sm:$0xff]
    %v85 = vld [vmem:[#allocation7 + $0x8] sm:$0xff]
    %v86 = vld [vmem:[#allocation7 + $0x10] sm:$0xff]
    %v87 = vld [vmem:[#allocation7 + $0x18] sm:$0xff]
    %v88 = vld [vmem:[#allocation7 + $0x20] sm:$0xff]
    %v89 = vld [vmem:[#allocation7 + $0x28] sm:$0xff]
    %v90 = vld [vmem:[#allocation7 + $0x30] sm:$0xff]
    %v91 = vld [vmem:[#allocation7 + $0x38] sm:$0xff]
    %v92 = vld [vmem:[#allocation7 + $0x40] sm:$0xff]
    %v93 = vld [vmem:[#allocation7 + $0x48] sm:$0xff]
    %v94 = vld [vmem:[#allocation7 + $0x50] sm:$0xff]
    %v95 = vld [vmem:[#allocation7 + $0x58] sm:$0xff]
    %v96 = vld [vmem:[#allocation7 + $0x60] sm:$0xff]
    %v97 = vld [vmem:[#allocation7 + $0x68] sm:$0xff]
    %v98 = vld [vmem:[#allocation7 + $0x70] sm:$0xff]
    %v99 = vld [vmem:[#allocation7 + $0x78] sm:$0xff]
    %v100 = vld [vmem:[#allocation5] sm:$0xff]
    %v101 = vld [vmem:[#allocation5 + $0x8] sm:$0xff]
    %v102 = vld [vmem:[#allocation8] sm:$0xff]
    %v103 = vld [vmem:[#allocation8 + $0x8] sm:$0xff]
    %v104 = vld [vmem:[#allocation8 + $0x10] sm:$0xff]
    %v105 = vld [vmem:[#allocation8 + $0x18] sm:$0xff]
    %v106 = vld [vmem:[#allocation8 + $0x20] sm:$0xff]
    %v107 = vld [vmem:[#allocation8 + $0x28] sm:$0xff]
    %v108 = vld [vmem:[#allocation8 + $0x30] sm:$0xff]
    %v109 = vld [vmem:[#allocation8 + $0x38] sm:$0xff]
    %v110 = vld [vmem:[#allocation8 + $0x40] sm:$0xff]
    %v111 = vld [vmem:[#allocation8 + $0x48] sm:$0xff]
    %v112 = vld [vmem:[#allocation8 + $0x50] sm:$0xff]
    %v113 = vld [vmem:[#allocation8 + $0x58] sm:$0xff]
    %v114 = vld [vmem:[#allocation8 + $0x60] sm:$0xff]
    %v115 = vld [vmem:[#allocation8 + $0x68] sm:$0xff]
    %v116 = vld [vmem:[#allocation8 + $0x70] sm:$0xff]
    %v117 = vld [vmem:[#allocation8 + $0x78] sm:$0xff]
    %118 = vmatprep.subr.mxu0 0.0
    %119 = vmatpush1.msra.mxu0 %v117
    %120 = vmatprep.subr.mxu0 0.0
    %121 = vmatpush1.msra.mxu0 %v116
    %122 = vmatprep.subr.mxu0 0.0
    %123 = vmatpush1.msra.mxu0 %v115
    %124 = vmatprep.subr.mxu0 0.0
    %125 = vmatpush1.msra.mxu0 %v114
    %126 = vmatprep.subr.mxu0 0.0
    %127 = vmatpush1.msra.mxu0 %v113
    %128 = vmatprep.subr.mxu0 0.0
    %129 = vmatpush1.msra.mxu0 %v112
    %130 = vmatprep.subr.mxu0 0.0
    %131 = vmatpush1.msra.mxu0 %v111
    %132 = vmatprep.subr.mxu0 0.0
    %133 = vmatpush1.msra.mxu0 %v110
    %134 = vmatprep.subr.mxu0 0.0
    %135 = vmatpush1.msra.mxu0 %v109
    %136 = vmatprep.subr.mxu0 0.0
    %137 = vmatpush1.msra.mxu0 %v108
    %138 = vmatprep.subr.mxu0 0.0
    %139 = vmatpush1.msra.mxu0 %v107
    %140 = vmatprep.subr.mxu0 0.0
    %141 = vmatpush1.msra.mxu0 %v106
    %142 = vmatprep.subr.mxu0 0.0
    %143 = vmatpush1.msra.mxu0 %v105
    %144 = vmatprep.subr.mxu0 0.0
    %145 = vmatpush1.msra.mxu0 %v104
    %146 = vmatprep.subr.mxu0 0.0
    %147 = vmatpush1.msra.mxu0 %v103
    %148 = vmatprep.subr.mxu0 0.0
    %149 = vmatpush1.msra.mxu0 %v102
    %150 = vmatprep.subr.mxu0 0.0
    %151 = vmatpush2.msra.mxu0 0.0
    %152 = vmatprep.subr.mxu0 0.0
    %153 = vmatpush2.msra.mxu0 0.0
    %154 = vmatprep.subr.mxu0 0.0
    %155 = vmatpush2.msra.mxu0 0.0
    %156 = vmatprep.subr.mxu0 0.0
    %157 = vmatpush2.msra.mxu0 0.0
    %158 = vmatprep.subr.mxu0 0.0
    %159 = vmatpush2.msra.mxu0 0.0
    %160 = vmatprep.subr.mxu0 0.0
    %161 = vmatpush2.msra.mxu0 0.0
    %162 = vmatprep.subr.mxu0 0.0
    %163 = vmatpush2.msra.mxu0 0.0
    %164 = vmatprep.subr.mxu0 0.0
    %165 = vmatpush2.msra.mxu0 0.0
    %166 = vmatprep.subr.mxu0 0.0
    %167 = vmatpush2.msra.mxu0 0.0
    %168 = vmatprep.subr.mxu0 0.0
    %169 = vmatpush2.msra.mxu0 0.0
    %170 = vmatprep.subr.mxu0 0.0
    %171 = vmatpush2.msra.mxu0 0.0
    %172 = vmatprep.subr.mxu0 0.0
    %173 = vmatpush2.msra.mxu0 0.0
    %174 = vmatprep.subr.mxu0 0.0
    %175 = vmatpush2.msra.mxu0 0.0
    %176 = vmatprep.subr.mxu0 0.0
    %177 = vmatpush2.msra.mxu0 0.0
    %178 = vmatprep.subr.mxu0 0.0
    %179 = vmatpush2.msra.mxu0 0.0
    %180 = vmatprep.subr.mxu0 0.0
    %181 = vmatpush2.msra.mxu0 0.0
    %182 = vmatprep.mubr.f32.mxu0 0.0
    %183 = vmatmul.mubr.f32.gmra.mxu0 %v100
    %v184 = vpop.f32.mrf.mxu0
    %v185 = vadd.f32 0.0, %v184
    %v186 = vpop.f32.mrf.mxu0
    %187 = vmatprep.mubr.f32.mxu0 0.0
    %188 = vmatmul.mubr.f32.gmra.mxu0 %v101
    %v189 = vpop.f32.mrf.mxu0
    %v190 = vadd.f32 0.0, %v189
    %v191 = vpop.f32.mrf.mxu0
    %192 = vdwg.mxu0
    %193 = vmatprep.subr.mxu0 0.0
    %194 = vmatpush1.msra.mxu0 %v99
    %195 = vmatprep.subr.mxu0 0.0
    %196 = vmatpush1.msra.mxu0 %v98
    %197 = vmatprep.subr.mxu0 0.0
    %198 = vmatpush1.msra.mxu0 %v97
    %199 = vmatprep.subr.mxu0 0.0
    %200 = vmatpush1.msra.mxu0 %v96
    %201 = vmatprep.subr.mxu0 0.0
    %202 = vmatpush1.msra.mxu0 %v95
    %203 = vmatprep.subr.mxu0 0.0
    %204 = vmatpush1.msra.mxu0 %v94
    %205 = vmatprep.subr.mxu0 0.0
    %206 = vmatpush1.msra.mxu0 %v93
    %207 = vmatprep.subr.mxu0 0.0
    %208 = vmatpush1.msra.mxu0 %v92
    %209 = vmatprep.subr.mxu0 0.0
    %210 = vmatpush1.msra.mxu0 %v91
    %211 = vmatprep.subr.mxu0 0.0
    %212 = vmatpush1.msra.mxu0 %v90
    %213 = vmatprep.subr.mxu0 0.0
    %214 = vmatpush1.msra.mxu0 %v89
    %215 = vmatprep.subr.mxu0 0.0
    %216 = vmatpush1.msra.mxu0 %v88
    %217 = vmatprep.subr.mxu0 0.0
    %218 = vmatpush1.msra.mxu0 %v87
    %219 = vmatprep.subr.mxu0 0.0
    %220 = vmatpush1.msra.mxu0 %v86
    %221 = vmatprep.subr.mxu0 0.0
    %222 = vmatpush1.msra.mxu0 %v85
    %223 = vmatprep.subr.mxu0 0.0
    %224 = vmatpush1.msra.mxu0 %v84
    %225 = vmatprep.subr.mxu0 0.0
    %226 = vmatpush2.msra.mxu0 0.0
    %227 = vmatprep.subr.mxu0 0.0
    %228 = vmatpush2.msra.mxu0 0.0
    %229 = vmatprep.subr.mxu0 0.0
    %230 = vmatpush2.msra.mxu0 0.0
    %231 = vmatprep.subr.mxu0 0.0
    %232 = vmatpush2.msra.mxu0 0.0
    %233 = vmatprep.subr.mxu0 0.0
    %234 = vmatpush2.msra.mxu0 0.0
    %235 = vmatprep.subr.mxu0 0.0
    %236 = vmatpush2.msra.mxu0 0.0
    %237 = vmatprep.subr.mxu0 0.0
    %238 = vmatpush2.msra.mxu0 0.0
    %239 = vmatprep.subr.mxu0 0.0
    %240 = vmatpush2.msra.mxu0 0.0
    %241 = vmatprep.subr.mxu0 0.0
    %242 = vmatpush2.msra.mxu0 0.0
    %243 = vmatprep.subr.mxu0 0.0
    %244 = vmatpush2.msra.mxu0 0.0
    %245 = vmatprep.subr.mxu0 0.0
    %246 = vmatpush2.msra.mxu0 0.0
    %247 = vmatprep.subr.mxu0 0.0
    %248 = vmatpush2.msra.mxu0 0.0
    %249 = vmatprep.subr.mxu0 0.0
    %250 = vmatpush2.msra.mxu0 0.0
    %251 = vmatprep.subr.mxu0 0.0
    %252 = vmatpush2.msra.mxu0 0.0
    %253 = vmatprep.subr.mxu0 0.0
    %254 = vmatpush2.msra.mxu0 0.0
    %255 = vmatprep.subr.mxu0 0.0
    %256 = vmatpush2.msra.mxu0 0.0
    %257 = vmatprep.mubr.f32.mxu0 0.0
    %258 = vmatmul.mubr.f32.gmra.mxu0 %v82
    %v259 = vpop.f32.mrf.mxu0
    %v260 = vadd.f32 %v185, %v259
    %v261 = vpop.f32.mrf.mxu0
    %262 = vmatprep.mubr.f32.mxu0 0.0
    %263 = vmatmul.mubr.f32.gmra.mxu0 %v83
    %v264 = vpop.f32.mrf.mxu0
    %v265 = vadd.f32 %v190, %v264
    %v266 = vpop.f32.mrf.mxu0
    %267 = vdwg.mxu0
    %v268 = vadd.f32 %v82, %v260
    %v269 = vadd.f32 %v83, %v265
    %v270 = vld [vmem:[%s4] sm:$0x1]
    %v272 = vlaneseq
    %v273 = vshrl.u32 %v272, 7
    %v274 = vsub.s32 0, %v273
    %v275 = vrot.slane %v270, %v274
    %v277 = vadd.f32 %v268, %v275
    %v278 = vadd.f32 %v269, %v275
    %v279 = vlaneseq
    %v280 = vand.u32 %v279, 127
    %vm281 = vcmp.lt.s32.totalorder %v280, 32
    %v282 = vsel %vm281, %v277, 0.0
    %v283 = vsel %vm281, %v278, 0.0
    %284 = vadd.xlane.f32.xlu0 %v282
    %v285 = vpop.xlane.xlu0 %284
    %286 = vadd.xlane.f32.xlu0 %v283
    %v287 = vpop.xlane.xlu0 %286
    %v288 = vmul.f32 %v285, 0.03125
    %v289 = vmul.f32 %v287, 0.03125
    %v290 = vsub.f32 %v277, %v288
    %v291 = vsub.f32 %v278, %v289
    %v292 = vsel %vm281, %v290, 0.0
    %v293 = vsel %vm281, %v291, 0.0
    %v294 = vmul.f32 %v292, %v292
    %v295 = vmul.f32 %v293, %v293
    %296 = vadd.xlane.f32.xlu0 %v294
    %v297 = vpop.xlane.xlu0 %296
    %298 = vadd.xlane.f32.xlu0 %v295
    %v299 = vpop.xlane.xlu0 %298
    %v300 = vmul.f32 %v297, 0.032258064
    %v301 = vmul.f32 %v299, 0.032258064
    %v302 = vrsqrt.pop %v300
    %v303 = vmul.f32 %v300, %v302
    %vm304 = vcmp.eq.f32.partialorder %v300, inf
    %v305 = vsel %vm304, %v300, %v303
    %vm306 = vcmp.eq.f32.partialorder %v300, 0.0
    %v307 = vand.u32 %v300, 2147483648
    %v308 = vsel %vm306, %v307, %v305
    %v309 = vrsqrt.pop %v301
    %v310 = vmul.f32 %v301, %v309
    %vm311 = vcmp.eq.f32.partialorder %v301, inf
    %v312 = vsel %vm311, %v301, %v310
    %vm313 = vcmp.eq.f32.partialorder %v301, 0.0
    %v314 = vand.u32 %v301, 2147483648
    %v315 = vsel %vm313, %v314, %v312
    %v316 = vadd.f32 %v308, 1e-06
    %v317 = vadd.f32 %v315, 1e-06
    %v318 = vrcp.pop %v316
    %v319 = vrcp.pop %v317
    %v320 = vld [vmem:[%s5] sm:$0x1]
    %v322 = vlaneseq
    %v323 = vshrl.u32 %v322, 7
    %v324 = vsub.s32 0, %v323
    %v325 = vrot.slane %v320, %v324
    %v327 = vmul.f32 %v325, %v318
    %v328 = vmul.f32 %v325, %v319
    %v329 = vmul.f32 %v327, %v290
    %v330 = vmul.f32 %v328, %v291
    %v331 = vld [vmem:[%s6] sm:$0x1]
    %v333 = vlaneseq
    %v334 = vshrl.u32 %v333, 7
    %v335 = vsub.s32 0, %v334
    %v336 = vrot.slane %v331, %v335
    %v338 = vadd.f32 %v329, %v336
    %v339 = vadd.f32 %v330, %v336
    %340 = vst [vmem:[#allocation10] sm:$0xff] %v338
    %341 = vst [vmem:[#allocation10 + $0x8] sm:$0xff] %v339
    // Predicated region
    $region46: #{tpu_custom_call.1} parent=1 // pred_check
      _
    $region47: #{tpu_custom_call.1} parent=1 // pred_check_branch
      %343 = sbr.rel (0) target = $region49
    $region48: #{tpu_custom_call.1} parent=1 // pred_region
      %s345 = ssub.s32 256, 256
      %346 = vsyncadd [#allocation4], %s345
      %s347 = sshll.u32 [#allocation10], 4
      %s348 = int_to_ptr.vmem [resolvable:$true] %s347
      %353 = dma.vmem_to_hbm [thread:$0]  %s348, 256, %s7, [#allocation4], 128, 128, 8
    $region49: #{tpu_custom_call.1} parent=1 // pred_fallthru
      _
    // Predicated region
    $region50: #{tpu_custom_call.1} parent=1 // pred_check
      _
    $region51: #{tpu_custom_call.1} parent=1 // pred_check_branch
      %355 = sbr.rel (0) target = $region53
    $region52: #{tpu_custom_call.1} parent=1 // pred_region
      %356 = dma.done [#allocation4], 256
    $region53: #{tpu_custom_call.1} parent=1 // pred_fallthru
      _
    %357 = vsyncpa [#allocation3], 1
    %358 = vsyncpa [#allocation6], 1
    %359 = vsyncpa [#allocation9], 1
    %360 = vsyncpa [#allocation4], 1

</llo_original>
